<compile_context>
chip_gen: v5e
topology: v5e:2x2
jax: 0.10.0
libtpu: 0.0.40
codegen_flags: <defaults>
</compile_context>

<pallas_src>
import functools
import math

import numpy as np
import jax
import jax.numpy as jnp
from jax import lax
from jax.experimental import pallas as pl
from jax.experimental.pallas import tpu as pltpu

MASKVAL = -1e30  # finite stand-in for -inf (avoids 0 * inf -> NaN)


def _round_up(x, m):
    return ((x + m - 1) // m) * m


# ---------------------------------------------------------------------------
# Deterministic omega (random-feature projection), as in Attention._omega.
# TODO(synk): QR-based omega construction is host-side numpy buffer setup,
# not kernel work.
# ---------------------------------------------------------------------------
def make_omega(nrows: int, ncols: int, seed: int = 0) -> np.ndarray:
    rng = np.random.RandomState(seed)
    nblocks = int(nrows / ncols)
    blocks = []
    for _ in range(nblocks):
        block = rng.normal(size=(ncols, ncols))
        q, _ = np.linalg.qr(block)
        blocks.append(np.transpose(q))
    missing_rows = nrows - nblocks * ncols
    if missing_rows > 0:
        block = rng.normal(size=(ncols, ncols))
        q, _ = np.linalg.qr(block)
        blocks.append(np.transpose(q)[:missing_rows])
    norm = np.linalg.norm(rng.normal(size=(nrows, ncols)), axis=1, keepdims=True)
    return (norm * np.vstack(blocks)).T  # (dim_qk, m)


# ---------------------------------------------------------------------------
# Exact attention: flash-style (q, k) tiling, block-sparse over segments.
# ---------------------------------------------------------------------------
def _exact_kernel(ks_ref, ke_ref, q_ref, k_ref, v_ref, sq_ref, sk_ref,
                  o_ref, m_sc, l_sc, *, d_orig, eps):
    qi = pl.program_id(0)
    kk = pl.program_id(1)

    @pl.when(kk == 0)
    def _init():
        m_sc[...] = jnp.full(m_sc.shape, MASKVAL, m_sc.dtype)
        l_sc[...] = jnp.zeros_like(l_sc)
        o_ref[...] = jnp.zeros_like(o_ref)

    # Skip clamped/repeated key blocks beyond this query tile's valid range.
    @pl.when(kk <= ke_ref[qi] - ks_ref[qi])
    def _step():
        # segment pair mask on the VPU (no MXU, no one-hot DMA)
        pair = sq_ref[...] == sk_ref[...]                              # (TQ, TK)
        s = lax.dot_general(q_ref[...], k_ref[...],
                            (((1,), (1,)), ((), ())),
                            preferred_element_type=jnp.float32)        # (TQ, TK)
        s = jnp.where(pair, s, MASKVAL)

        inv_sqrt_d = 1.0 / math.sqrt(d_orig)
        m_prev = m_sc[...]
        m_new = jnp.maximum(m_prev, jnp.max(s, axis=-1, keepdims=True))
        a = jnp.exp((m_prev - m_new) * inv_sqrt_d)
        # gate p with the mask so fully-masked prefixes contribute exactly 0
        p = jnp.where(pair, jnp.exp((s - m_new) * inv_sqrt_d), 0.0)
        l_sc[...] = a * l_sc[...] + jnp.sum(p, axis=-1, keepdims=True)
        # accumulate directly into the (resident) output block; bf16 operands,
        # f32 accumulation on the value matmul
        o_ref[...] = a * o_ref[...] + jnp.dot(p.astype(jnp.bfloat16),
                                              v_ref[...].astype(jnp.bfloat16),
                                              preferred_element_type=jnp.float32)
        m_sc[...] = m_new

    @pl.when(kk == pl.num_programs(1) - 1)
    def _final():
        o_ref[...] = o_ref[...] * pl.reciprocal(l_sc[...] + eps, approx=True)


# ---------------------------------------------------------------------------
# Approximate (Performer) attention.
# Fused pass 1+2: per-segment max of K@omega (phase 0) and per-segment KV
# summaries KV[b] = sum_{j in b} phi(K_j) (x) [V_j, 1]  (phase 1).
# ---------------------------------------------------------------------------
def _kv_kernel(smin_ref, smax_ref, k_ref, v_ref, seg_ref, omega_ref,
               kv_ref, kmax_sc, *, num_batch, d_orig, m_orig, eps_phi, init_val):
    phase = pl.program_id(0)
    t = pl.program_id(1)

    @pl.when((phase == 0) & (t == 0))
    def _init():
        kmax_sc[...] = jnp.full(kmax_sc.shape, init_val, kmax_sc.dtype)
        kv_ref[...] = jnp.zeros_like(kv_ref)

    K = k_ref[...]                                                     # (TR, d)
    seg = seg_ref[...]                                                 # (TR, 1)
    U = jnp.dot(K, omega_ref[...], preferred_element_type=jnp.float32)  # (TR, m)
    lo = smin_ref[t]
    hi = smax_ref[t]

    @pl.when(phase == 0)
    def _phase_max():
        rowmax = jnp.max(U, axis=-1, keepdims=True)                    # (TR, 1)
        for b in range(num_batch):
            @pl.when((b >= lo) & (b <= hi))
            def _upd(b=b):
                cand = jnp.max(jnp.where(seg == b, rowmax, init_val),
                               axis=0, keepdims=True)                  # (1, 1)
                kmax_sc[b:b + 1, 0:1] = jnp.maximum(kmax_sc[b:b + 1, 0:1], cand)

    @pl.when(phase == 1)
    def _phase_kv():
        V = v_ref[...]                                                 # (TR, dv+1)
        h = jnp.sum(K * K, axis=-1, keepdims=True) * (0.5 / math.sqrt(d_orig))
        inv_sqrt_m = 1.0 / math.sqrt(m_orig)
        for b in range(num_batch):
            @pl.when((b >= lo) & (b <= hi))
            def _acc(b=b):
                maximum = kmax_sc[b:b + 1, 0:1]                        # (1, 1)
                Kp = (jnp.exp(U - h - maximum) + eps_phi) * inv_sqrt_m
                Kp = jnp.where(seg == b, Kp, 0.0)                      # pad rows -> 0
                kv_ref[b] = kv_ref[b] + lax.dot_general(
                    Kp, V, (((0,), (0,)), ((), ())),
                    preferred_element_type=jnp.float32)                # (m, dv+1)


# Pass 3: stream query tiles -> output  y_i = phi(Q_i) @ KV[seg_i].
def _approx_out_kernel(smin_ref, smax_ref, q_ref, seg_ref, omega_ref, kv_ref,
                       o_ref, acc_sc, *, num_batch, d_orig, m_orig, dv_orig,
                       eps_phi, eps):
    t = pl.program_id(0)
    Q = q_ref[...]                                                     # (TR, d)
    seg = seg_ref[...]                                                 # (TR, 1)
    U = jnp.dot(Q, omega_ref[...], preferred_element_type=jnp.float32)  # (TR, m)
    h = jnp.sum(Q * Q, axis=-1, keepdims=True) * (0.5 / math.sqrt(d_orig))
    maximum = jnp.max(U, axis=-1, keepdims=True)
    Qp = (jnp.exp(U - h - maximum) + eps_phi) * (1.0 / math.sqrt(m_orig))

    acc_sc[...] = jnp.zeros_like(acc_sc)
    lo = smin_ref[t]
    hi = smax_ref[t]
    for b in range(num_batch):
        @pl.when((b >= lo) & (b <= hi))
        def _acc(b=b):
            contrib = jnp.dot(Qp, kv_ref[b],
                              preferred_element_type=jnp.float32)       # (TR, dv+1)
            acc_sc[...] += jnp.where(seg == b, contrib, 0.0)

    res = acc_sc[...]
    # last column of the KV summary carries sum(Kp) -> the norm denominator
    norm = res[:, dv_orig:dv_orig + 1] + eps
    o_ref[...] = res[:, :dv_orig] * pl.reciprocal(norm, approx=True)


# ---------------------------------------------------------------------------
# Wrapper (mirrors Attention.forward).
# ---------------------------------------------------------------------------
def attention_forward(Q, K, V, num_batch, batch_seg, omega=None,
                      eps=1e-8, eps_phi=1e-4):
    Q = jnp.asarray(Q, jnp.float32)
    K = jnp.asarray(K, jnp.float32)
    V = jnp.asarray(V, jnp.float32)
    num_batch = int(num_batch)
    N, d_qk = Q.shape
    dv = V.shape[-1]

    # Row tile: 256 rows (MXU-native on v6e/v7x, amortizes per-step overhead
    # on v5e).  Working set is a few hundred KiB -- far below any VMEM limit.
    T = 256 if N >= 256 else _round_up(N, 8)
    N_pad = _round_up(N, T)
    n_tiles = N_pad // T

    # Host-side schedule (like a page table): per-row-tile segment span.
    seg_np = np.asarray(batch_seg).astype(np.int64).reshape(-1)
    smin_tile = np.zeros(n_tiles, np.int32)
    smax_tile = np.full(n_tiles, -1, np.int32)
    for ti in range(n_tiles):
        r0, r1 = ti * T, min(N, (ti + 1) * T)
        if r0 < r1:
            smin_tile[ti] = int(seg_np[r0:r1].min())
            smax_tile[ti] = int(seg_np[r0:r1].max())

    # Row padding only (feature dims stay un-padded -> 8x less HBM traffic).
    Qp_ = jnp.pad(Q, ((0, N_pad - N), (0, 0)))
    Kp_ = jnp.pad(K, ((0, N_pad - N), (0, 0)))
    seg = jnp.asarray(seg_np, jnp.int32)
    # padded rows get sentinel seg ids that never match a real segment
    seg_col = jnp.pad(seg.reshape(N, 1), ((0, N_pad - N), (0, 0)),
                      constant_values=-1)

    if omega is None:
        # ------------------------------------------------ exact attention
        Vp_ = jnp.pad(V, ((0, N_pad - N), (0, 0)))
        seg_row = jnp.pad(seg.reshape(1, N), ((0, 0), (0, N_pad - N)),
                          constant_values=-2)

        # Block-sparse key ranges per query tile (contiguous segments).
        kstart = np.zeros(n_tiles, np.int32)
        kend = np.full(n_tiles, n_tiles - 1, np.int32)
        contiguous = bool(np.all(np.diff(seg_np) >= 0)) if N > 1 else True
        if contiguous and num_batch > 1:
            seg_first, seg_last = {}, {}
            for b in range(num_batch):
                idx = np.nonzero(seg_np == b)[0]
                if idx.size:
                    seg_first[b] = int(idx[0])
                    seg_last[b] = int(idx[-1])
            for qi in range(n_tiles):
                lo_s, hi_s = int(smin_tile[qi]), int(smax_tile[qi])
                if hi_s < lo_s:          # padding-only tile (defensive)
                    kstart[qi], kend[qi] = 0, 0
                    continue
                kstart[qi] = seg_first[lo_s] // T
                kend[qi] = seg_last[hi_s] // T
        max_kb = int(np.max(kend - kstart)) + 1

        def _kmap(qi, kk, ks, ke):
            return (jnp.minimum(ks[qi] + kk, ke[qi]), 0)

        def _kmap_row(qi, kk, ks, ke):
            return (0, jnp.minimum(ks[qi] + kk, ke[qi]))

        grid_spec = pltpu.PrefetchScalarGridSpec(
            num_scalar_prefetch=2,
            grid=(n_tiles, max_kb),
            in_specs=[
                pl.BlockSpec((T, d_qk), lambda qi, kk, ks, ke: (qi, 0)),
                pl.BlockSpec((T, d_qk), _kmap),
                pl.BlockSpec((T, dv), _kmap),
                pl.BlockSpec((T, 1), lambda qi, kk, ks, ke: (qi, 0)),
                pl.BlockSpec((1, T), _kmap_row),
            ],
            out_specs=pl.BlockSpec((T, dv), lambda qi, kk, ks, ke: (qi, 0)),
            scratch_shapes=[pltpu.VMEM((T, 1), jnp.float32),
                            pltpu.VMEM((T, 1), jnp.float32)],
        )
        y_pad = pl.pallas_call(
            functools.partial(_exact_kernel, d_orig=d_qk, eps=eps),
            out_shape=jax.ShapeDtypeStruct((N_pad, dv), jnp.float32),
            grid_spec=grid_spec,
            compiler_params=pltpu.CompilerParams(
                dimension_semantics=("parallel", "arbitrary")),
            cost_estimate=pl.CostEstimate(
                flops=int(2 * n_tiles * max_kb * T * T * (d_qk + dv)),
                transcendentals=int(n_tiles * max_kb * T * T),
                bytes_accessed=int(4 * (N_pad * d_qk
                                        + n_tiles * max_kb * T * (d_qk + dv)
                                        + N_pad * dv))),
        )(jnp.asarray(kstart), jnp.asarray(kend),
          Qp_, Kp_, Vp_, seg_col, seg_row)
        return y_pad[:N, :]

    # --------------------------------------------- Performer (linear) attention
    omega = jnp.asarray(omega, jnp.float32)
    m = omega.shape[-1]
    omega_s = omega * (d_qk ** -0.25)     # fold the 1/d^0.25 scale into omega
    dvc = dv + 1                          # extra column carries sum(Kp) (the norm)

    V_aug = jnp.concatenate([V, jnp.ones((N, 1), jnp.float32)], axis=1)
    V_aug = jnp.pad(V_aug, ((0, N_pad - N), (0, 0)))   # pad rows are all-zero

    # Reference quirk (num_batch > 1): key max is over mask*U, so the
    # per-segment max is clamped at 0; for num_batch == 1 it is the global max.
    init_val = 0.0 if num_batch > 1 else MASKVAL
    smin_j = jnp.asarray(smin_tile)
    smax_j = jnp.asarray(smax_tile)

    # Fused pass 1+2: phase 0 = per-segment max, phase 1 = KV accumulation.
    kv = pl.pallas_call(
        functools.partial(_kv_kernel, num_batch=num_batch, d_orig=d_qk,
                          m_orig=m, eps_phi=eps_phi, init_val=init_val),
        out_shape=jax.ShapeDtypeStruct((num_batch, m, dvc), jnp.float32),
        grid_spec=pltpu.PrefetchScalarGridSpec(
            num_scalar_prefetch=2,
            grid=(2, n_tiles),
            in_specs=[
                pl.BlockSpec((T, d_qk), lambda p, t, lo, hi: (t, 0)),
                pl.BlockSpec((T, dvc), lambda p, t, lo, hi: (t, 0)),
                pl.BlockSpec((T, 1), lambda p, t, lo, hi: (t, 0)),
                pl.BlockSpec((d_qk, m), lambda p, t, lo, hi: (0, 0)),
            ],
            out_specs=pl.BlockSpec((num_batch, m, dvc),
                                   lambda p, t, lo, hi: (0, 0, 0)),
            scratch_shapes=[pltpu.VMEM((num_batch, 128), jnp.float32)],
        ),
        compiler_params=pltpu.CompilerParams(
            dimension_semantics=("arbitrary", "arbitrary")),
        cost_estimate=pl.CostEstimate(
            flops=int(n_tiles * (4 * T * d_qk * m + 2 * T * m * dvc)),
            transcendentals=int(n_tiles * T * m),
            bytes_accessed=int(4 * 2 * N_pad * (d_qk + dvc + 1))),
    )(smin_j, smax_j, Kp_, V_aug, seg_col, omega_s)

    # Pass 3: query tiles -> output ("parallel" axis; per-segment KV gather).
    y_pad = pl.pallas_call(
        functools.partial(_approx_out_kernel, num_batch=num_batch, d_orig=d_qk,
                          m_orig=m, dv_orig=dv, eps_phi=eps_phi, eps=eps),
        out_shape=jax.ShapeDtypeStruct((N_pad, dv), jnp.float32),
        grid_spec=pltpu.PrefetchScalarGridSpec(
            num_scalar_prefetch=2,
            grid=(n_tiles,),
            in_specs=[
                pl.BlockSpec((T, d_qk), lambda t, lo, hi: (t, 0)),
                pl.BlockSpec((T, 1), lambda t, lo, hi: (t, 0)),
                pl.BlockSpec((d_qk, m), lambda t, lo, hi: (0, 0)),
                pl.BlockSpec((num_batch, m, dvc), lambda t, lo, hi: (0, 0, 0)),
            ],
            out_specs=pl.BlockSpec((T, dv), lambda t, lo, hi: (t, 0)),
            scratch_shapes=[pltpu.VMEM((T, dvc), jnp.float32)],
        ),
        compiler_params=pltpu.CompilerParams(
            dimension_semantics=("parallel",)),
        cost_estimate=pl.CostEstimate(
            flops=int(n_tiles * (2 * T * d_qk * m + 2 * T * m * dvc)),
            transcendentals=int(n_tiles * T * m),
            bytes_accessed=int(4 * N_pad * (d_qk + dv + 1))),
    )(smin_j, smax_j, Qp_, seg_col, omega_s, kv)
    return y_pad[:N, :]


# ---------------------------------------------------------------------------
# Pure-numpy reference (mirrors the PyTorch module) for correctness checks.
# ---------------------------------------------------------------------------
def _ref_phi(X, omega, is_query, num_batch, batch_seg, eps=1e-4):
    X = np.asarray(X, np.float64)
    omega = np.asarray(omega, np.float64)
    d = X.shape[-1]
    m = omega.shape[-1]
    U = (X / d ** 0.25) @ omega
    h = np.sum(X ** 2, -1, keepdims=True) / (2 * d ** 0.5)
    if is_query:
        maximum = np.max(U, -1, keepdims=True)
    elif num_batch > 1:
        seg = np.asarray(batch_seg)
        maximum = np.zeros((X.shape[0], 1))
        for b in range(num_batch):
            masked = np.where((seg == b)[:, None], U, 0.0)
            maximum[seg == b, 0] = masked.max()
    else:
        maximum = np.max(U)
    return (np.exp(U - h - maximum) + eps) / math.sqrt(m)


def _ref_approx(Q, K, V, num_batch, batch_seg, omega, eps=1e-8):
    Qp = _ref_phi(Q, omega, True, num_batch, batch_seg)
    Kp = _ref_phi(K, omega, False, num_batch, batch_seg)
    V = np.asarray(V, np.float64)
    seg = np.asarray(batch_seg)
    if num_batch > 1:
        m = Qp.shape[-1]
        tmp = np.zeros((num_batch, m))
        for b in range(num_batch):
            tmp[b] = Kp[seg == b].sum(0)
        norm = (Qp @ tmp.T)[np.arange(len(seg)), seg][:, None] + eps
        one_hot = np.eye(num_batch)[seg]
        mask = one_hot @ one_hot.T
        return (mask * (Kp @ Qp.T)).T @ V / norm
    norm = Qp @ Kp.sum(0, keepdims=True).T + eps
    return Qp @ (Kp.T @ V) / norm


def _ref_exact(Q, K, V, num_batch, batch_seg, eps=1e-8):
    Q = np.asarray(Q, np.float64)
    K = np.asarray(K, np.float64)
    V = np.asarray(V, np.float64)
    d = Q.shape[-1]
    dot = Q @ K.T
    A = np.exp((dot - dot.max()) / d ** 0.5)
    if num_batch > 1:
        seg = np.asarray(batch_seg)
        A = A * (seg[:, None] == seg[None, :]).astype(A.dtype)
    norm = A.sum(-1, keepdims=True) + eps
    return (A / norm) @ V


# ---------------------------------------------------------------------------
if __name__ == "__main__":
    key = jax.random.PRNGKey(0)
    kq, kk_, kv_, kq2, kk2, kv2 = jax.random.split(key, 6)

    # --- small single-tile case (the SpookyNet docstring example) -----------
    N, dim_qk, dim_v, nrf = 8, 16, 16, 32
    batch_seg = jnp.array([0, 0, 0, 1, 1, 1, 1, 1], dtype=jnp.int32)
    Q = jax.random.normal(kq, (N, dim_qk), dtype=jnp.float32)
    K = jax.random.normal(kk_, (N, dim_qk), dtype=jnp.float32)
    V = jax.random.normal(kv_, (N, dim_v), dtype=jnp.float32)
    omega = jnp.asarray(make_omega(nrf, dim_qk, seed=0), dtype=jnp.float32)

    y_a2 = attention_forward(Q, K, V, 2, batch_seg, omega=omega)
    y_a1 = attention_forward(Q, K, V, 1, jnp.zeros((N,), jnp.int32), omega=omega)
    y_e2 = attention_forward(Q, K, V, 2, batch_seg, omega=None)
    jax.block_until_ready((y_a2, y_a1, y_e2))

    np.testing.assert_allclose(np.asarray(y_a2),
                               _ref_approx(Q, K, V, 2, batch_seg, omega),
                               rtol=2e-2, atol=1e-2)
    np.testing.assert_allclose(np.asarray(y_a1),
                               _ref_approx(Q, K, V, 1, np.zeros(N, np.int64), omega),
                               rtol=2e-2, atol=1e-2)
    np.testing.assert_allclose(np.asarray(y_e2),
                               _ref_exact(Q, K, V, 2, batch_seg),
                               rtol=2e-2, atol=1e-2)

    # --- multi-tile case (3 molecules; exercises block-sparse skipping) -----
    N2 = 520
    seg2 = jnp.asarray(np.repeat(np.arange(3), (100, 250, 170)), jnp.int32)
    Q2 = jax.random.normal(kq2, (N2, dim_qk), dtype=jnp.float32)
    K2 = jax.random.normal(kk2, (N2, dim_qk), dtype=jnp.float32)
    V2 = jax.random.normal(kv2, (N2, dim_v), dtype=jnp.float32)

    y2_a = attention_forward(Q2, K2, V2, 3, seg2, omega=omega)
    y2_e = attention_forward(Q2, K2, V2, 3, seg2, omega=None)
    jax.block_until_ready((y2_a, y2_e))

    np.testing.assert_allclose(np.asarray(y2_a),
                               _ref_approx(Q2, K2, V2, 3, seg2, omega),
                               rtol=2e-2, atol=1e-2)
    np.testing.assert_allclose(np.asarray(y2_e),
                               _ref_exact(Q2, K2, V2, 3, seg2),
                               rtol=2e-2, atol=1e-2)

    print("KERNEL_OK")
</pallas_src>

<mosaic_0001>
module attributes {stable_mosaic.version = 11 : i64} {
  func.func @_kv_kernel(%arg0: i32, %arg1: i32, %arg2: memref<1xi32, #tpu.memory_space<smem>>, %arg3: memref<1xi32, #tpu.memory_space<smem>>, %arg4: memref<8x16xf32, #tpu.memory_space<vmem>>, %arg5: memref<8x17xf32, #tpu.memory_space<vmem>>, %arg6: memref<8x1xi32, #tpu.memory_space<vmem>>, %arg7: memref<16x32xf32, #tpu.memory_space<vmem>>, %arg8: memref<2x32x17xf32, #tpu.memory_space<vmem>>, %arg9: memref<2x128xf32, #tpu.memory_space<vmem>>) attributes {dimension_semantics = [#tpu.dimension_semantics<arbitrary>, #tpu.dimension_semantics<arbitrary>], iteration_bounds = array<i64: 2, 1>, scalar_prefetch = 2 : i64, scratch_operands = 1 : i64, tpu.core_type = #tpu.core_type<tc>, window_params = [{transform_indices = @transform_0, window_bounds = array<i64: 8, 16>}, {transform_indices = @transform_1, window_bounds = array<i64: 8, 17>}, {transform_indices = @transform_2, window_bounds = array<i64: 8, 1>}, {pipeline_mode = #tpu.pipeline_mode<synchronous>, transform_indices = @transform_3, window_bounds = array<i64: 16, 32>}, {pipeline_mode = #tpu.pipeline_mode<synchronous>, transform_indices = @transform_4, window_bounds = array<i64: 2, 32, 17>}]} {
    %c0_i32 = arith.constant 0 : i32
    %0 = arith.cmpi eq, %arg0, %c0_i32 : i32
    %c0_i32_0 = arith.constant 0 : i32
    %1 = arith.cmpi eq, %arg1, %c0_i32_0 : i32
    %2 = arith.andi %0, %1 : i1
    %3 = arith.extui %2 : i1 to i32
    %c0_i32_1 = arith.constant 0 : i32
    %4 = arith.cmpi ne, %3, %c0_i32_1 : i32
    scf.if %4 {
      %cst_10 = arith.constant 0.000000e+00 : f32
      %19 = vector.broadcast %cst_10 : f32 to vector<2x128xf32>
      %c0_11 = arith.constant 0 : index
      %c0_12 = arith.constant 0 : index
      %20 = vector.load %arg9[%c0_11, %c0_12] : memref<2x128xf32, #tpu.memory_space<vmem>>, vector<2x128xf32>
      tpu.vector_store %arg9[%c0_11, %c0_12], %19 {strides = array<i32>} : memref<2x128xf32, #tpu.memory_space<vmem>>, vector<2x128xf32>,
      %cst_13 = arith.constant 0.000000e+00 : f32
      %21 = vector.broadcast %cst_13 : f32 to vector<2x32x17xf32>
      %c0_14 = arith.constant 0 : index
      %c0_15 = arith.constant 0 : index
      %c0_16 = arith.constant 0 : index
      %22 = vector.load %arg8[%c0_14, %c0_15, %c0_16] : memref<2x32x17xf32, #tpu.memory_space<vmem>>, vector<2x32x17xf32>
      tpu.vector_store %arg8[%c0_14, %c0_15, %c0_16], %21 {strides = array<i32>} : memref<2x32x17xf32, #tpu.memory_space<vmem>>, vector<2x32x17xf32>,
    } else {
    }
    %c0 = arith.constant 0 : index
    %c0_2 = arith.constant 0 : index
    %5 = vector.load %arg4[%c0, %c0_2] : memref<8x16xf32, #tpu.memory_space<vmem>>, vector<8x16xf32>
    %c0_3 = arith.constant 0 : index
    %c0_4 = arith.constant 0 : index
    %6 = vector.load %arg6[%c0_3, %c0_4] : memref<8x1xi32, #tpu.memory_space<vmem>>, vector<8x1xi32>
    %c0_5 = arith.constant 0 : index
    %c0_6 = arith.constant 0 : index
    %7 = vector.load %arg7[%c0_5, %c0_6] : memref<16x32xf32, #tpu.memory_space<vmem>>, vector<16x32xf32>
    %cst = arith.constant dense<0.000000e+00> : vector<8x32xf32>
    %8 = tpu.matmul %5, %7, %cst {dimension_numbers = #tpu.dot_dimension_numbers<[1], [0], [0], [1], [0, 0, 1, 1], [], []>} : vector<8x16xf32>, vector<16x32xf32>, vector<8x32xf32> -> vector<8x32xf32>
    %9 = arith.index_cast %arg1 : i32 to index
    %10 = memref.load %arg2[%9] : memref<1xi32, #tpu.memory_space<smem>>
    %11 = arith.index_cast %arg1 : i32 to index
    %12 = memref.load %arg3[%11] : memref<1xi32, #tpu.memory_space<smem>>
    %c0_i32_7 = arith.constant 0 : i32
    %13 = arith.cmpi eq, %arg0, %c0_i32_7 : i32
    %14 = arith.extui %13 : i1 to i32
    %c0_i32_8 = arith.constant 0 : i32
    %15 = arith.cmpi ne, %14, %c0_i32_8 : i32
    scf.if %15 {
      %cst_10 = arith.constant dense<0xFF800000> : vector<8xf32>
      %19 = vector.multi_reduction <maximumf>, %8, %cst_10 [1] : vector<8x32xf32> to vector<8xf32>
      %20 = vector.shape_cast %19 : vector<8xf32> to vector<8x1xf32>
      %c0_i32_11 = arith.constant 0 : i32
      %21 = arith.cmpi sle, %10, %c0_i32_11 : i32
      %c0_i32_12 = arith.constant 0 : i32
      %22 = arith.cmpi sge, %12, %c0_i32_12 : i32
      %23 = arith.andi %21, %22 : i1
      %24 = arith.extui %23 : i1 to i32
      %c0_i32_13 = arith.constant 0 : i32
      %25 = arith.cmpi ne, %24, %c0_i32_13 : i32
      scf.if %25 {
        %c0_i32_17 = arith.constant 0 : i32
        %31 = vector.broadcast %c0_i32_17 : i32 to vector<8x1xi32>
        %32 = arith.cmpi eq, %6, %31 : vector<8x1xi32>
        %cst_18 = arith.constant 0.000000e+00 : f32
        %33 = vector.broadcast %cst_18 : f32 to vector<8x1xf32>
        %34 = arith.select %32, %20, %33 : vector<8x1xi1>, vector<8x1xf32>
        %cst_19 = arith.constant dense<0xFF800000> : vector<1xf32>
        %35 = vector.multi_reduction <maximumf>, %34, %cst_19 [0] : vector<8x1xf32> to vector<1xf32>
        %36 = vector.shape_cast %35 : vector<1xf32> to vector<1x1xf32>
        %c0_20 = arith.constant 0 : index
        %c0_21 = arith.constant 0 : index
        %37 = vector.load %arg9[%c0_20, %c0_21] : memref<2x128xf32, #tpu.memory_space<vmem>>, vector<1x1xf32>
        %38 = arith.maximumf %37, %36 : vector<1x1xf32>
        %c0_22 = arith.constant 0 : index
        %c0_23 = arith.constant 0 : index
        %39 = vector.load %arg9[%c0_22, %c0_23] : memref<2x128xf32, #tpu.memory_space<vmem>>, vector<1x1xf32>
        tpu.vector_store %arg9[%c0_22, %c0_23], %38 {strides = array<i32>} : memref<2x128xf32, #tpu.memory_space<vmem>>, vector<1x1xf32>,
      } else {
      }
      %c1_i32_14 = arith.constant 1 : i32
      %26 = arith.cmpi sle, %10, %c1_i32_14 : i32
      %c1_i32_15 = arith.constant 1 : i32
      %27 = arith.cmpi sge, %12, %c1_i32_15 : i32
      %28 = arith.andi %26, %27 : i1
      %29 = arith.extui %28 : i1 to i32
      %c0_i32_16 = arith.constant 0 : i32
      %30 = arith.cmpi ne, %29, %c0_i32_16 : i32
      scf.if %30 {
        %c1_i32_17 = arith.constant 1 : i32
        %31 = vector.broadcast %c1_i32_17 : i32 to vector<8x1xi32>
        %32 = arith.cmpi eq, %6, %31 : vector<8x1xi32>
        %cst_18 = arith.constant 0.000000e+00 : f32
        %33 = vector.broadcast %cst_18 : f32 to vector<8x1xf32>
        %34 = arith.select %32, %20, %33 : vector<8x1xi1>, vector<8x1xf32>
        %cst_19 = arith.constant dense<0xFF800000> : vector<1xf32>
        %35 = vector.multi_reduction <maximumf>, %34, %cst_19 [0] : vector<8x1xf32> to vector<1xf32>
        %36 = vector.shape_cast %35 : vector<1xf32> to vector<1x1xf32>
        %c1 = arith.constant 1 : index
        %c0_20 = arith.constant 0 : index
        %37 = vector.load %arg9[%c1, %c0_20] : memref<2x128xf32, #tpu.memory_space<vmem>>, vector<1x1xf32>
        %38 = arith.maximumf %37, %36 : vector<1x1xf32>
        %c1_21 = arith.constant 1 : index
        %c0_22 = arith.constant 0 : index
        %39 = vector.load %arg9[%c1_21, %c0_22] : memref<2x128xf32, #tpu.memory_space<vmem>>, vector<1x1xf32>
        tpu.vector_store %arg9[%c1_21, %c0_22], %38 {strides = array<i32>} : memref<2x128xf32, #tpu.memory_space<vmem>>, vector<1x1xf32>,
      } else {
      }
    } else {
    }
    %c1_i32 = arith.constant 1 : i32
    %16 = arith.cmpi eq, %arg0, %c1_i32 : i32
    %17 = arith.extui %16 : i1 to i32
    %c0_i32_9 = arith.constant 0 : i32
    %18 = arith.cmpi ne, %17, %c0_i32_9 : i32
    scf.if %18 {
      %c0_10 = arith.constant 0 : index
      %c0_11 = arith.constant 0 : index
      %19 = vector.load %arg5[%c0_10, %c0_11] : memref<8x17xf32, #tpu.memory_space<vmem>>, vector<8x17xf32>
      %20 = arith.mulf %5, %5 : vector<8x16xf32>
      %cst_12 = arith.constant dense<0.000000e+00> : vector<8xf32>
      %21 = vector.multi_reduction <add>, %20, %cst_12 [1] : vector<8x16xf32> to vector<8xf32>
      %22 = vector.shape_cast %21 : vector<8xf32> to vector<8x1xf32>
      %cst_13 = arith.constant 1.250000e-01 : f32
      %23 = vector.broadcast %cst_13 : f32 to vector<8x1xf32>
      %24 = arith.mulf %22, %23 : vector<8x1xf32>
      %c0_i32_14 = arith.constant 0 : i32
      %25 = arith.cmpi sle, %10, %c0_i32_14 : i32
      %c0_i32_15 = arith.constant 0 : i32
      %26 = arith.cmpi sge, %12, %c0_i32_15 : i32
      %27 = arith.andi %25, %26 : i1
      %28 = arith.extui %27 : i1 to i32
      %c0_i32_16 = arith.constant 0 : i32
      %29 = arith.cmpi ne, %28, %c0_i32_16 : i32
      scf.if %29 {
        %c0_20 = arith.constant 0 : index
        %c0_21 = arith.constant 0 : index
        %35 = vector.load %arg9[%c0_20, %c0_21] : memref<2x128xf32, #tpu.memory_space<vmem>>, vector<1x1xf32>
        %36 = vector.broadcast %24 : vector<8x1xf32> to vector<8x32xf32>
        %37 = arith.subf %8, %36 : vector<8x32xf32>
        %38 = vector.broadcast %35 : vector<1x1xf32> to vector<8x32xf32>
        %39 = arith.subf %37, %38 : vector<8x32xf32>
        %40 = math.exp %39 : vector<8x32xf32>
        %cst_22 = arith.constant 9.99999974E-5 : f32
        %41 = vector.broadcast %cst_22 : f32 to vector<8x32xf32>
        %42 = arith.addf %40, %41 : vector<8x32xf32>
        %cst_23 = arith.constant 0.176776692 : f32
        %43 = vector.broadcast %cst_23 : f32 to vector<8x32xf32>
        %44 = arith.mulf %42, %43 : vector<8x32xf32>
        %c0_i32_24 = arith.constant 0 : i32
        %45 = vector.broadcast %c0_i32_24 : i32 to vector<8x1xi32>
        %46 = arith.cmpi eq, %6, %45 : vector<8x1xi32>
        %cst_25 = arith.constant 0.000000e+00 : f32
        %47 = vector.shape_cast %46 : vector<8x1xi1> to vector<8x1xi1>
        %48 = vector.broadcast %47 : vector<8x1xi1> to vector<8x32xi1>
        %49 = vector.broadcast %cst_25 : f32 to vector<8x32xf32>
        %50 = arith.select %48, %44, %49 : vector<8x32xi1>, vector<8x32xf32>
        %c0_26 = arith.constant 0 : index
        %c0_27 = arith.constant 0 : index
        %c0_28 = arith.constant 0 : index
        %51 = vector.load %arg8[%c0_26, %c0_27, %c0_28] : memref<2x32x17xf32, #tpu.memory_space<vmem>>, vector<1x32x17xf32>
        %52 = vector.shape_cast %51 : vector<1x32x17xf32> to vector<32x17xf32>
        %cst_29 = arith.constant dense<0.000000e+00> : vector<32x17xf32>
        %53 = tpu.matmul %50, %19, %cst_29 {dimension_numbers = #tpu.dot_dimension_numbers<[0], [0], [1], [1], [0, 1, 1, 1], [], []>} : vector<8x32xf32>, vector<8x17xf32>, vector<32x17xf32> -> vector<32x17xf32>
        %54 = arith.addf %52, %53 : vector<32x17xf32>
        %c0_30 = arith.constant 0 : index
        %c0_31 = arith.constant 0 : index
        %c0_32 = arith.constant 0 : index
        %55 = vector.load %arg8[%c0_30, %c0_31, %c0_32] : memref<2x32x17xf32, #tpu.memory_space<vmem>>, vector<1x32x17xf32>
        %56 = vector.shape_cast %55 : vector<1x32x17xf32> to vector<32x17xf32>
        %57 = vector.shape_cast %54 : vector<32x17xf32> to vector<1x32x17xf32>
        tpu.vector_store %arg8[%c0_30, %c0_31, %c0_32], %57 {strides = array<i32>} : memref<2x32x17xf32, #tpu.memory_space<vmem>>, vector<1x32x17xf32>,
      } else {
      }
      %c1_i32_17 = arith.constant 1 : i32
      %30 = arith.cmpi sle, %10, %c1_i32_17 : i32
      %c1_i32_18 = arith.constant 1 : i32
      %31 = arith.cmpi sge, %12, %c1_i32_18 : i32
      %32 = arith.andi %30, %31 : i1
      %33 = arith.extui %32 : i1 to i32
      %c0_i32_19 = arith.constant 0 : i32
      %34 = arith.cmpi ne, %33, %c0_i32_19 : i32
      scf.if %34 {
        %c1 = arith.constant 1 : index
        %c0_20 = arith.constant 0 : index
        %35 = vector.load %arg9[%c1, %c0_20] : memref<2x128xf32, #tpu.memory_space<vmem>>, vector<1x1xf32>
        %36 = vector.broadcast %24 : vector<8x1xf32> to vector<8x32xf32>
        %37 = arith.subf %8, %36 : vector<8x32xf32>
        %38 = vector.broadcast %35 : vector<1x1xf32> to vector<8x32xf32>
        %39 = arith.subf %37, %38 : vector<8x32xf32>
        %40 = math.exp %39 : vector<8x32xf32>
        %cst_21 = arith.constant 9.99999974E-5 : f32
        %41 = vector.broadcast %cst_21 : f32 to vector<8x32xf32>
        %42 = arith.addf %40, %41 : vector<8x32xf32>
        %cst_22 = arith.constant 0.176776692 : f32
        %43 = vector.broadcast %cst_22 : f32 to vector<8x32xf32>
        %44 = arith.mulf %42, %43 : vector<8x32xf32>
        %c1_i32_23 = arith.constant 1 : i32
        %45 = vector.broadcast %c1_i32_23 : i32 to vector<8x1xi32>
        %46 = arith.cmpi eq, %6, %45 : vector<8x1xi32>
        %cst_24 = arith.constant 0.000000e+00 : f32
        %47 = vector.shape_cast %46 : vector<8x1xi1> to vector<8x1xi1>
        %48 = vector.broadcast %47 : vector<8x1xi1> to vector<8x32xi1>
        %49 = vector.broadcast %cst_24 : f32 to vector<8x32xf32>
        %50 = arith.select %48, %44, %49 : vector<8x32xi1>, vector<8x32xf32>
        %c1_25 = arith.constant 1 : index
        %c0_26 = arith.constant 0 : index
        %c0_27 = arith.constant 0 : index
        %51 = vector.load %arg8[%c1_25, %c0_26, %c0_27] : memref<2x32x17xf32, #tpu.memory_space<vmem>>, vector<1x32x17xf32>
        %52 = vector.shape_cast %51 : vector<1x32x17xf32> to vector<32x17xf32>
        %cst_28 = arith.constant dense<0.000000e+00> : vector<32x17xf32>
        %53 = tpu.matmul %50, %19, %cst_28 {dimension_numbers = #tpu.dot_dimension_numbers<[0], [0], [1], [1], [0, 1, 1, 1], [], []>} : vector<8x32xf32>, vector<8x17xf32>, vector<32x17xf32> -> vector<32x17xf32>
        %54 = arith.addf %52, %53 : vector<32x17xf32>
        %c1_29 = arith.constant 1 : index
        %c0_30 = arith.constant 0 : index
        %c0_31 = arith.constant 0 : index
        %55 = vector.load %arg8[%c1_29, %c0_30, %c0_31] : memref<2x32x17xf32, #tpu.memory_space<vmem>>, vector<1x32x17xf32>
        %56 = vector.shape_cast %55 : vector<1x32x17xf32> to vector<32x17xf32>
        %57 = vector.shape_cast %54 : vector<32x17xf32> to vector<1x32x17xf32>
        tpu.vector_store %arg8[%c1_29, %c0_30, %c0_31], %57 {strides = array<i32>} : memref<2x32x17xf32, #tpu.memory_space<vmem>>, vector<1x32x17xf32>,
      } else {
      }
    } else {
    }
    return
  }
  func.func @transform_0(%arg0: i32, %arg1: i32, %arg2: memref<1xi32, #tpu.memory_space<smem>>, %arg3: memref<1xi32, #tpu.memory_space<smem>>) -> (i32, i32) {
    %c0_i32 = arith.constant 0 : i32
    %c0_i32_0 = arith.constant 0 : i32
    return %arg1, %c0_i32 : i32, i32
  }
  func.func @transform_1(%arg0: i32, %arg1: i32, %arg2: memref<1xi32, #tpu.memory_space<smem>>, %arg3: memref<1xi32, #tpu.memory_space<smem>>) -> (i32, i32) {
    %c0_i32 = arith.constant 0 : i32
    %c0_i32_0 = arith.constant 0 : i32
    return %arg1, %c0_i32 : i32, i32
  }
  func.func @transform_2(%arg0: i32, %arg1: i32, %arg2: memref<1xi32, #tpu.memory_space<smem>>, %arg3: memref<1xi32, #tpu.memory_space<smem>>) -> (i32, i32) {
    %c0_i32 = arith.constant 0 : i32
    %c0_i32_0 = arith.constant 0 : i32
    return %arg1, %c0_i32 : i32, i32
  }
  func.func @transform_3(%arg0: i32, %arg1: i32, %arg2: memref<1xi32, #tpu.memory_space<smem>>, %arg3: memref<1xi32, #tpu.memory_space<smem>>) -> (i32, i32) {
    %c0_i32 = arith.constant 0 : i32
    %c0_i32_0 = arith.constant 0 : i32
    %c0_i32_1 = arith.constant 0 : i32
    return %c0_i32, %c0_i32_0 : i32, i32
  }
  func.func @transform_4(%arg0: i32, %arg1: i32, %arg2: memref<1xi32, #tpu.memory_space<smem>>, %arg3: memref<1xi32, #tpu.memory_space<smem>>) -> (i32, i32, i32) {
    %c0_i32 = arith.constant 0 : i32
    %c0_i32_0 = arith.constant 0 : i32
    %c0_i32_1 = arith.constant 0 : i32
    %c0_i32_2 = arith.constant 0 : i32
    return %c0_i32, %c0_i32_0, %c0_i32_1 : i32, i32, i32
  }
}

</mosaic_0001>

<llo_original>
// kernel: tpu_custom_call.1
$region0: #{tpu_custom_call.1}
  #allocation0 [shape = 'u32[]', space=smem, size = 0x4, offset = 0x4, fixed_abs, tag = 'smem constant byte address 0x4 - core index']
  #allocation1 [shape = 'u32[72,128]{1,0:T(1,128)}', space=vmem, size = 0x9000, scoped, tag = 'internal scratch']
  #allocation2 [shape = 'f32[2,128]{1,0:T(2,128)}', space=vmem, size = 0x400, scoped, tag = 'scratch operand']
  #allocation3 [shape = 's32[1]{0}', space=sflag, size = 0x4, scoped, tag = 'scoped memory for tpu_custom_call.1']
  #allocation4 [shape = 's32[1]{0:T(128)S(6)}', space=smem, size = 0x200, scoped, tag = 'prefetched SMEM operand 0']
  #allocation5 [shape = 's32[1]{0:T(128)S(6)}', space=smem, size = 0x200, scoped, tag = 'prefetched SMEM operand 1']
  %s0 = inlined_call_operand.<no memory space> [shape: s32[1], index: 0, kind: input, shape index: {}]
  %s1 = inlined_call_operand.<no memory space> [shape: s32[1], index: 1, kind: input, shape index: {}]
  %s2 = inlined_call_operand.vmem [shape: f32[8,16], index: 2, kind: input, shape index: {}]
  %s3 = inlined_call_operand.hbm [shape: f32[8,17], index: 3, kind: input, shape index: {}]
  %s4 = inlined_call_operand.vmem [shape: s32[8,1], index: 4, kind: input, shape index: {}]
  %s5 = inlined_call_operand.hbm [shape: f32[16,32], index: 5, kind: input, shape index: {}]
  %s6 = inlined_call_operand.vmem [shape: f32[2,32,17], index: 6, kind: output, shape index: {}]
  %s7 = sld [smem:[#allocation0]]
  $region85: #{tpu_custom_call.1} parent=0
    _
  %s9 = ssub.s32 1, %s7
  %s10 = scalar_select 0, %s9, %s7
  %11 = sst [smem:[#allocation4]] %s0
  %12 = sst [smem:[#allocation5]] %s1
  $region1: #{tpu_custom_call.1} parent=0
    #allocation6 [shape = 'u8[4096]{0}', space=vmem, size = 0x1000, scoped, tag = 'input window, operand 3, single buffered']
    #allocation7 [shape = 's32[2]{0}', space=sflag, size = 0x8, scoped, tag = 'scoped memory for tpu_custom_call.1']
    #allocation8 [shape = 'u8[8192]{0}', space=vmem, size = 0x2000, scoped, tag = 'input window, operand 5, single buffered']
    #allocation9 [shape = 's32[1]{0}', space=sflag, size = 0x4, scoped, tag = 'scoped memory for tpu_custom_call.1']
    %13 = vsyncpa [#allocation7], 0
    %14 = vsyncpa [#allocation9], 0
    loop: start=0, step=1, limit=4
    $region2: #{tpu_custom_call.1} parent=1 // loop_pre_header
      _
    $region3: #{tpu_custom_call.1} parent=1 // loop_header
      %s16 = sphi 0, %s20
      %p17 = scmp.ge.s32.totalorder %s16, 4
      %s23 = sphi 0, %s35
      %s24 = sphi 0, %s31
      %s25 = sphi 0, %s23
      %s26 = sphi 0, %s24
      %s27 = sphi 0, %s25
      %s28 = sphi 0, %s26
      %s38 = sphi 0, %s40
      %s41 = sphi 0, %s38
      %s42 = sphi 0, %s41
      %s58 = sphi 0, %s42
      %s64 = sphi 0, %s66
      %s67 = sphi 0, %s64
      %s68 = sphi 0, %s67
      %s84 = sphi 0, %s68
      %s90 = sphi 0, %s92
      %s93 = sphi 0, %s90
      %s94 = sphi 0, %s93
      %s110 = sphi 0, %s94
      %s114 = sphi 0, %s114
      %s116 = sphi 0, %s114
      %s117 = sphi 0, %s116
      %s131 = sphi 0, %s117
      %s135 = sphi 0, %s135
      %s137 = sphi 0, %s135
      %s138 = sphi 0, %s137
      %s152 = sphi 0, %s138
    $region4: #{tpu_custom_call.1} parent=1 // loop_header_branch
      %19 = sbr.rel (%p17) target = $region8
    $region5: #{tpu_custom_call.1} parent=1 // loop_body
      %s21 = ssub.s32 %s16, 1
      %s22 = ssub.s32 %s16, 2
      %s29 = sadd.s32 1, %s24
      %p30 = scmp.ge.s32.totalorder %s29, 1
      %s31 = scalar_select %p30, 0, %s29
      %s32 = sadd.s32 1, %s23
      %s33 = scalar_select %p30, %s32, %s23
      %p34 = scmp.ge.s32.totalorder %s33, 2
      %s35 = scalar_select %p34, 0, %s33
      %s36 = ssub.s32 %s24, %s31
      %p37 = scmp.eq.s32.totalorder %s36, 0
      %s39 = sadd.s32 %s38, 1
      %s40 = scalar_select %p37, %s38, %s39
      %p43 = pneg %p37
      %p44 = scmp.eq.s32.totalorder %s16, 1
      %p45 = por %p43, %p44
      %p46 = scmp.ne.s32.totalorder %s38, %s41
      %p47 = scmp.eq.s32.totalorder %s16, 0
      %p48 = por %p46, %p47
      %p49 = scmp.ne.s32.totalorder %s38, %s41
      %p50 = scmp.eq.s32.totalorder %s21, 1
      %p51 = por %p49, %p50
      %p52 = scmp.ne.s32.totalorder %s41, %s42
      %p53 = scmp.eq.s32.totalorder %s21, 0
      %p54 = por %p52, %p53
      %p55 = scmp.ne.s32.totalorder %s41, %s42
      %p56 = scmp.eq.s32.totalorder %s22, 1
      %p57 = por %p55, %p56
      %p59 = scmp.ne.s32.totalorder %s42, %s58
      %p60 = scmp.eq.s32.totalorder %s22, 0
      %p61 = por %p59, %p60
      %s62 = ssub.s32 %s24, %s31
      %p63 = scmp.eq.s32.totalorder %s62, 0
      %s65 = sadd.s32 %s64, 1
      %s66 = scalar_select %p63, %s64, %s65
      %p69 = pneg %p63
      %p70 = scmp.eq.s32.totalorder %s16, 1
      %p71 = por %p69, %p70
      %p72 = scmp.ne.s32.totalorder %s64, %s67
      %p73 = scmp.eq.s32.totalorder %s16, 0
      %p74 = por %p72, %p73
      %p75 = scmp.ne.s32.totalorder %s64, %s67
      %p76 = scmp.eq.s32.totalorder %s21, 1
      %p77 = por %p75, %p76
      %p78 = scmp.ne.s32.totalorder %s67, %s68
      %p79 = scmp.eq.s32.totalorder %s21, 0
      %p80 = por %p78, %p79
      %p81 = scmp.ne.s32.totalorder %s67, %s68
      %p82 = scmp.eq.s32.totalorder %s22, 1
      %p83 = por %p81, %p82
      %p85 = scmp.ne.s32.totalorder %s68, %s84
      %p86 = scmp.eq.s32.totalorder %s22, 0
      %p87 = por %p85, %p86
      %s88 = ssub.s32 %s24, %s31
      %p89 = scmp.eq.s32.totalorder %s88, 0
      %s91 = sadd.s32 %s90, 1
      %s92 = scalar_select %p89, %s90, %s91
      %p95 = pneg %p89
      %p96 = scmp.eq.s32.totalorder %s16, 1
      %p97 = por %p95, %p96
      %p98 = scmp.ne.s32.totalorder %s90, %s93
      %p99 = scmp.eq.s32.totalorder %s16, 0
      %p100 = por %p98, %p99
      %p101 = scmp.ne.s32.totalorder %s90, %s93
      %p102 = scmp.eq.s32.totalorder %s21, 1
      %p103 = por %p101, %p102
      %p104 = scmp.ne.s32.totalorder %s93, %s94
      %p105 = scmp.eq.s32.totalorder %s21, 0
      %p106 = por %p104, %p105
      %p107 = scmp.ne.s32.totalorder %s93, %s94
      %p108 = scmp.eq.s32.totalorder %s22, 1
      %p109 = por %p107, %p108
      %p111 = scmp.ne.s32.totalorder %s94, %s110
      %p112 = scmp.eq.s32.totalorder %s22, 0
      %p113 = por %p111, %p112
      %s115 = sadd.s32 %s114, 1
      %p118 = scmp.eq.s32.totalorder %s16, 1
      %p119 = scmp.ne.s32.totalorder %s114, %s116
      %p120 = scmp.eq.s32.totalorder %s16, 0
      %p121 = por %p119, %p120
      %p122 = scmp.ne.s32.totalorder %s114, %s116
      %p123 = scmp.eq.s32.totalorder %s21, 1
      %p124 = por %p122, %p123
      %p125 = scmp.ne.s32.totalorder %s116, %s117
      %p126 = scmp.eq.s32.totalorder %s21, 0
      %p127 = por %p125, %p126
      %p128 = scmp.ne.s32.totalorder %s116, %s117
      %p129 = scmp.eq.s32.totalorder %s22, 1
      %p130 = por %p128, %p129
      %p132 = scmp.ne.s32.totalorder %s117, %s131
      %p133 = scmp.eq.s32.totalorder %s22, 0
      %p134 = por %p132, %p133
      %s136 = sadd.s32 %s135, 1
      %p139 = scmp.eq.s32.totalorder %s16, 1
      %p140 = scmp.ne.s32.totalorder %s135, %s137
      %p141 = scmp.eq.s32.totalorder %s16, 0
      %p142 = por %p140, %p141
      %p143 = scmp.ne.s32.totalorder %s135, %s137
      %p144 = scmp.eq.s32.totalorder %s21, 1
      %p145 = por %p143, %p144
      %p146 = scmp.ne.s32.totalorder %s137, %s138
      %p147 = scmp.eq.s32.totalorder %s21, 0
      %p148 = por %p146, %p147
      %p149 = scmp.ne.s32.totalorder %s137, %s138
      %p150 = scmp.eq.s32.totalorder %s22, 1
      %p151 = por %p149, %p150
      %p153 = scmp.ne.s32.totalorder %s138, %s152
      %p154 = scmp.eq.s32.totalorder %s22, 0
      %p155 = por %p153, %p154
      %p156 = scmp.le.s32.totalorder 1, %s16
      %p157 = scmp.lt.s32.totalorder %s16, 3
      %p158 = pnand %p156, %p157
      %p159 = pneg %p158
      // Predicated region
      $region9: #{tpu_custom_call.1} parent=5 // pred_check
        _
      $region10: #{tpu_custom_call.1} parent=5 // pred_check_branch
        %161 = sbr.rel (%p158) target = $region12
      $region11: #{tpu_custom_call.1} parent=5 // pred_region
        %s162 = ssub.s32 %s16, 1
        // Predicated region
        $region13: #{tpu_custom_call.1} parent=11 // pred_check
          %p163 = pneg %p54
        $region14: #{tpu_custom_call.1} parent=11 // pred_check_branch
          %165 = sbr.rel (%p163) target = $region16
        $region15: #{tpu_custom_call.1} parent=11 // pred_region
          %p166 = scmp.lt.s32.totalorder %s26, 0
          %s167 = scalar_select %p166, %s26, 0
          %s168 = smul.addr %s167, 8
          %s169 = scalar_lea.vmem %s2, %s168
        $region16: #{tpu_custom_call.1} parent=11 // pred_fallthru
          _
        // Predicated region
        $region17: #{tpu_custom_call.1} parent=11 // pred_check
          %p170 = pneg %p80
        $region18: #{tpu_custom_call.1} parent=11 // pred_check_branch
          %172 = sbr.rel (%p170) target = $region20
        $region19: #{tpu_custom_call.1} parent=11 // pred_region
          %174 = vsyncadd [#allocation7], 0
          %s175 = smul.addr %s26, 8
          %s176 = scalar_lea.hbm %s3, %s175
          %s178 = sshll.u32 %s176, 4
          %s179 = int_to_ptr.hbm [resolvable:$true] %s178
          %s180 = sshll.u32 [#allocation6], 4
          %s181 = int_to_ptr.vmem [resolvable:$true] %s180
          %183 = dma.hbm_to_vmem [thread:$0]  %s179, 128, %s181, [#allocation7]
        $region20: #{tpu_custom_call.1} parent=11 // pred_fallthru
          _
        // Predicated region
        $region21: #{tpu_custom_call.1} parent=11 // pred_check
          %p184 = pneg %p106
        $region22: #{tpu_custom_call.1} parent=11 // pred_check_branch
          %186 = sbr.rel (%p184) target = $region24
        $region23: #{tpu_custom_call.1} parent=11 // pred_region
          %p187 = scmp.lt.s32.totalorder %s26, 0
          %s188 = scalar_select %p187, %s26, 0
          %s189 = smul.addr %s188, 8
          %s190 = scalar_lea.vmem %s4, %s189
        $region24: #{tpu_custom_call.1} parent=11 // pred_fallthru
          _
        // Predicated region
        $region25: #{tpu_custom_call.1} parent=11 // pred_check
          %p191 = pneg %p127
        $region26: #{tpu_custom_call.1} parent=11 // pred_check_branch
          %193 = sbr.rel (%p191) target = $region28
        $region27: #{tpu_custom_call.1} parent=11 // pred_region
          %195 = vsyncadd [#allocation9], 0
          %s196 = sshll.u32 %s5, 4
          %s197 = int_to_ptr.hbm [resolvable:$true] %s196
          %s198 = sshll.u32 [#allocation8], 4
          %s199 = int_to_ptr.vmem [resolvable:$true] %s198
          %204 = dma.hbm_to_vmem [thread:$0]  %s197, 256, %s199, [#allocation9], 128, 128, 8
        $region28: #{tpu_custom_call.1} parent=11 // pred_fallthru
          _
      $region12: #{tpu_custom_call.1} parent=5 // pred_fallthru
        _
      %p205 = scmp.lt.s32.totalorder %s16, 2
      // Predicated region
      $region29: #{tpu_custom_call.1} parent=5 // pred_check
        %p206 = pneg %p205
      $region30: #{tpu_custom_call.1} parent=5 // pred_check_branch
        %208 = sbr.rel (%p206) target = $region32
      $region31: #{tpu_custom_call.1} parent=5 // pred_region
        _
      $region32: #{tpu_custom_call.1} parent=5 // pred_fallthru
        _
      %p209 = scmp.le.s32.totalorder 1, %s16
      %p210 = scmp.lt.s32.totalorder %s16, 3
      %p211 = pnand %p209, %p210
      %p212 = pneg %p211
      // Predicated region
      $region33: #{tpu_custom_call.1} parent=5 // pred_check
        _
      $region34: #{tpu_custom_call.1} parent=5 // pred_check_branch
        %214 = sbr.rel (%p211) target = $region36
      $region35: #{tpu_custom_call.1} parent=5 // pred_region
        %s215 = ssub.s32 %s16, 1
        // Predicated region
        $region37: #{tpu_custom_call.1} parent=35 // pred_check
          %p216 = pneg %p80
        $region38: #{tpu_custom_call.1} parent=35 // pred_check_branch
          %218 = sbr.rel (%p216) target = $region40
        $region39: #{tpu_custom_call.1} parent=35 // pred_region
          %220 = dma.done [#allocation7], 128
        $region40: #{tpu_custom_call.1} parent=35 // pred_fallthru
          _
        // Predicated region
        $region41: #{tpu_custom_call.1} parent=35 // pred_check
          %p221 = pneg %p127
        $region42: #{tpu_custom_call.1} parent=35 // pred_check_branch
          %223 = sbr.rel (%p221) target = $region44
        $region43: #{tpu_custom_call.1} parent=35 // pred_region
          %225 = dma.done [#allocation9], 256
        $region44: #{tpu_custom_call.1} parent=35 // pred_fallthru
          _
        %p226 = scmp.lt.s32.totalorder %s26, 0
        %s227 = scalar_select %p226, %s26, 0
        %s228 = smul.addr %s227, 8
        %s229 = scalar_lea.vmem %s2, %s228
        %p230 = pneg %p54
        %p231 = pneg %p51
        %p232 = pneg %p80
        %p233 = pneg %p77
        %p234 = scmp.lt.s32.totalorder %s26, 0
        %s235 = scalar_select %p234, %s26, 0
        %s236 = smul.addr %s235, 8
        %s237 = scalar_lea.vmem %s4, %s236
        %p238 = pneg %p106
        %p239 = pneg %p103
        %p240 = pneg %p127
        %p241 = pneg %p124
        %p242 = pneg %p148
        %p243 = pneg %p145
        %p244 = scmp.lt.s32.totalorder %s26, 0
        %s245 = scalar_select %p244, %s26, 0
        %s246 = smul.addr %s245, 8
        %s247 = scalar_lea.vmem %s2, %s246
        %p248 = scmp.lt.s32.totalorder %s26, 0
        %s249 = scalar_select %p248, %s26, 0
        %s250 = smul.addr %s249, 8
        %s251 = scalar_lea.vmem %s4, %s250
        %p252 = scmp.eq.s32.totalorder %s25, 0
        %p253 = scmp.eq.s32.totalorder %s26, 0
        %p254 = pnand %p252, %p253
        %p255 = pneg %p254
        // Predicated region
        $region45: #{tpu_custom_call.1} parent=35 // pred_check
          _
        $region46: #{tpu_custom_call.1} parent=35 // pred_check_branch
          %257 = sbr.rel (%p254) target = $region48
        $region47: #{tpu_custom_call.1} parent=35 // pred_region
          %258 = vst [vmem:[#allocation2] sm:$0x3] 0.0
          %vm259 = vcmask 138240
          %260 = vst.msk [vmem:[%s6] sm:$0xff] %vm259, 0.0
          %261 = vst.msk [vmem:[%s6 + $0x8] sm:$0xff] %vm259, 0.0
          %262 = vst.msk [vmem:[%s6 + $0x10] sm:$0xff] %vm259, 0.0
          %263 = vst.msk [vmem:[%s6 + $0x18] sm:$0xff] %vm259, 0.0
          %264 = vst.msk [vmem:[%s6 + $0x20] sm:$0xff] %vm259, 0.0
          %265 = vst.msk [vmem:[%s6 + $0x28] sm:$0xff] %vm259, 0.0
          %266 = vst.msk [vmem:[%s6 + $0x30] sm:$0xff] %vm259, 0.0
          %267 = vst.msk [vmem:[%s6 + $0x38] sm:$0xff] %vm259, 0.0
        $region48: #{tpu_custom_call.1} parent=35 // pred_fallthru
          _
        %v268 = vld [vmem:[%s247] sm:$0xff]
        %v269 = vld [vmem:[%s251] sm:$0xff]
        %v270 = vld [vmem:[#allocation8] sm:$0xff]
        %v271 = vld [vmem:[#allocation8 + $0x8] sm:$0xff]
        %vm272 = vcmask 130048
        %v274 = vsel %vm272, %v268, 0
        %276 = vmatpush.msra.mxu0 0.0
        %277 = vmatpush.msra.mxu0 0.0
        %278 = vmatpush.msra.mxu0 0.0
        %279 = vmatpush.msra.mxu0 0.0
        %280 = vmatpush.msra.mxu0 0.0
        %281 = vmatpush.msra.mxu0 0.0
        %282 = vmatpush.msra.mxu0 0.0
        %283 = vmatpush.msra.mxu0 0.0
        %284 = vmatpush.msra.mxu0 0.0
        %285 = vmatpush.msra.mxu0 0.0
        %286 = vmatpush.msra.mxu0 0.0
        %287 = vmatpush.msra.mxu0 0.0
        %288 = vmatpush.msra.mxu0 0.0
        %289 = vmatpush.msra.mxu0 0.0
        %290 = vmatpush.msra.mxu0 %v271
        %291 = vmatpush.msra.mxu0 %v270
        %292 = vmatmul.f32.gmra.mxu0 %v274
        %v293 = vpop.f32.mrf.mxu0
        %v294 = vadd.f32 0.0, %v293
        %295 = vdwg.mxu0
        %s296 = sld [smem:[#allocation4 + %s26]]
        %s297 = sld [smem:[#allocation5 + %s26]]
        // Predicated region
        $region49: #{tpu_custom_call.1} parent=35 // pred_check
          %p298 = pneg %p252
        $region50: #{tpu_custom_call.1} parent=35 // pred_check_branch
          %300 = sbr.rel (%p298) target = $region52
        $region51: #{tpu_custom_call.1} parent=35 // pred_region
          %vm301 = vcmask 261120
          %v302 = vsel %vm301, %v294, -inf
          %303 = vmax.xlane.f32.xlu0 %v302
          %v304 = vpop.xlane.xlu0 %303
          %p305 = scmp.le.s32.totalorder %s296, 0
          %p306 = scmp.ge.s32.totalorder %s297, 0
          %p307 = pnand %p305, %p306
          %p308 = pneg %p307
          // Predicated region
          $region53: #{tpu_custom_call.1} parent=51 // pred_check
            _
          $region54: #{tpu_custom_call.1} parent=51 // pred_check_branch
            %310 = sbr.rel (%p307) target = $region56
          $region55: #{tpu_custom_call.1} parent=51 // pred_region
            %vm311 = vcmp.eq.s32.totalorder %v269, 0
            %v312 = vsel %vm311, %v304, 0.0
            %vm313 = vcmask 7168
            %v314 = vsel %vm313, %v312, -inf
            %v315 = vrot.slane %v314, 4
            %v316 = vmax.f32 %v314, %v315
            %v317 = vrot.slane %v316, 2
            %v318 = vmax.f32 %v316, %v317
            %v319 = vrot.slane %v318, 1
            %v320 = vmax.f32 %v318, %v319
            %v321 = vld [vmem:[#allocation2] sm:$0x1]
            %v322 = vmax.f32 %v321, %v320
            %vm323 = vcmask 0
            %324 = vst.msk [vmem:[#allocation2] sm:$0x1] %vm323, %v322
          $region56: #{tpu_custom_call.1} parent=51 // pred_fallthru
            _
          %p325 = scmp.le.s32.totalorder %s296, 1
          %p326 = scmp.ge.s32.totalorder %s297, 1
          %p327 = pnand %p325, %p326
          %p328 = pneg %p327
          // Predicated region
          $region57: #{tpu_custom_call.1} parent=51 // pred_check
            _
          $region58: #{tpu_custom_call.1} parent=51 // pred_check_branch
            %330 = sbr.rel (%p327) target = $region60
          $region59: #{tpu_custom_call.1} parent=51 // pred_region
            %vm331 = vcmp.eq.s32.totalorder %v269, 1
            %v332 = vsel %vm331, %v304, 0.0
            %vm333 = vcmask 7168
            %v334 = vsel %vm333, %v332, -inf
            %v335 = vrot.slane %v334, 4
            %v336 = vmax.f32 %v334, %v335
            %v337 = vrot.slane %v336, 2
            %v338 = vmax.f32 %v336, %v337
            %v339 = vrot.slane %v338, 1
            %v340 = vmax.f32 %v338, %v339
            %v341 = vld [vmem:[#allocation2 + $0x1] sm:$0x1]
            %v342 = vmax.f32 %v341, %v340
            %vm343 = vcmask 0
            %344 = vst.msk [vmem:[#allocation2 + $0x1] sm:$0x1] %vm343, %v342
          $region60: #{tpu_custom_call.1} parent=51 // pred_fallthru
            _
        $region52: #{tpu_custom_call.1} parent=35 // pred_fallthru
          _
        %p345 = scmp.eq.s32.totalorder %s25, 1
        // Predicated region
        $region61: #{tpu_custom_call.1} parent=35 // pred_check
          %p346 = pneg %p345
        $region62: #{tpu_custom_call.1} parent=35 // pred_check_branch
          %348 = sbr.rel (%p346) target = $region64
        $region63: #{tpu_custom_call.1} parent=35 // pred_region
          %v349 = vld [vmem:[#allocation6] sm:$0xff]
          %v350 = vmul.f32 %v268, %v268
          %v351 = vsel %vm272, %v350, 0.0
          %352 = vadd.xlane.f32.xlu0 %v351
          %v353 = vpop.xlane.xlu0 %352
          %v354 = vmul.f32 %v353, 0.125
          %p355 = scmp.le.s32.totalorder %s296, 0
          %p356 = scmp.ge.s32.totalorder %s297, 0
          %p357 = pnand %p355, %p356
          %p358 = pneg %p357
          // Predicated region
          $region65: #{tpu_custom_call.1} parent=63 // pred_check
            _
          $region66: #{tpu_custom_call.1} parent=63 // pred_check_branch
            %360 = sbr.rel (%p357) target = $region68
          $region67: #{tpu_custom_call.1} parent=63 // pred_region
            %v361 = vld [vmem:[#allocation2] sm:$0x1]
            %v362 = vsub.f32 %v294, %v354
            %s364 = vtos %v361
            %v365 = vstv %s364
            %v367 = vsub.f32 %v362, %v365
            %v368 = vmul.f32 %v367, 1.442695
            %v369 = vpow.pop %v368
            %v370 = vadd.f32 %v369, 0.0001
            %v371 = vmul.f32 %v370, 0.17677669
            %vm372 = vcmp.eq.s32.totalorder %v269, 0
            %v373 = vsel %vm372, 1, 0
            %374 = vset.pattern.permute.xlu0 0
            %375 = vperm.xlu0 %374, %v373
            %v376 = vpop.permute.xlu0 %375
            %vm377 = vcmp.eq.s32.totalorder %v376, 1
            %v378 = vsel %vm377, %v371, 0.0
            %v379 = vld [vmem:[%s6] sm:$0xff]
            %v380 = vld [vmem:[%s6 + $0x8] sm:$0xff]
            %v381 = vld [vmem:[%s6 + $0x10] sm:$0xff]
            %v382 = vld [vmem:[%s6 + $0x18] sm:$0xff]
            %383 = vxpose.xlu0.b32.start [1/16] %v378, 128
            %384 = vxpose.xlu0.b32.cont [2/16] 0.0, 128
            %385 = vxpose.xlu0.b32.cont [3/16] 0.0, 128
            %386 = vxpose.xlu0.b32.cont [4/16] 0.0, 128
            %387 = vxpose.xlu0.b32.cont [5/16] 0.0, 128
            %388 = vxpose.xlu0.b32.cont [6/16] 0.0, 128
            %389 = vxpose.xlu0.b32.cont [7/16] 0.0, 128
            %390 = vxpose.xlu0.b32.cont [8/16] 0.0, 128
            %391 = vxpose.xlu0.b32.cont [9/16] 0.0, 128
            %392 = vxpose.xlu0.b32.cont [10/16] 0.0, 128
            %393 = vxpose.xlu0.b32.cont [11/16] 0.0, 128
            %394 = vxpose.xlu0.b32.cont [12/16] 0.0, 128
            %395 = vxpose.xlu0.b32.cont [13/16] 0.0, 128
            %396 = vxpose.xlu0.b32.cont [14/16] 0.0, 128
            %397 = vxpose.xlu0.b32.cont [15/16] 0.0, 128
            %398 = vxpose.xlu0.b32.end [16/16] 0.0, 128
            %v399 = vpop.trf.xlu0
            %v400 = vpop.trf.xlu0
            %v401 = vpop.trf.xlu0
            %v402 = vpop.trf.xlu0
            %v403 = vpop.trf.xlu0
            %v404 = vpop.trf.xlu0
            %v405 = vpop.trf.xlu0
            %v406 = vpop.trf.xlu0
            %v407 = vpop.trf.xlu0
            %v408 = vpop.trf.xlu0
            %v409 = vpop.trf.xlu0
            %v410 = vpop.trf.xlu0
            %v411 = vpop.trf.xlu0
            %v412 = vpop.trf.xlu0
            %v413 = vpop.trf.xlu0
            %v414 = vpop.trf.xlu0
            %vm415 = vcmask 64512
            %v417 = vsel %vm415, %v399, 0
            %v420 = vsel %vm415, %v400, 0
            %v423 = vsel %vm415, %v401, 0
            %v426 = vsel %vm415, %v402, 0
            %428 = vmatpush.msra.mxu0 0.0
            %429 = vmatpush.msra.mxu0 0.0
            %430 = vmatpush.msra.mxu0 0.0
            %431 = vmatpush.msra.mxu0 0.0
            %432 = vmatpush.msra.mxu0 0.0
            %433 = vmatpush.msra.mxu0 0.0
            %434 = vmatpush.msra.mxu0 0.0
            %435 = vmatpush.msra.mxu0 0.0
            %436 = vmatpush.msra.mxu0 0.0
            %437 = vmatpush.msra.mxu0 0.0
            %438 = vmatpush.msra.mxu0 0.0
            %439 = vmatpush.msra.mxu0 0.0
            %440 = vmatpush.msra.mxu0 0.0
            %441 = vmatpush.msra.mxu0 0.0
            %442 = vmatpush.msra.mxu0 0.0
            %443 = vmatpush.msra.mxu0 %v349
            %444 = vmatmul.f32.gmra.mxu0 %v417
            %v445 = vpop.f32.mrf.mxu0
            %v446 = vadd.f32 0.0, %v445
            %447 = vmatmul.f32.gmra.mxu0 %v420
            %v448 = vpop.f32.mrf.mxu0
            %v449 = vadd.f32 0.0, %v448
            %450 = vmatmul.f32.gmra.mxu0 %v423
            %v451 = vpop.f32.mrf.mxu0
            %v452 = vadd.f32 0.0, %v451
            %453 = vmatmul.f32.gmra.mxu0 %v426
            %v454 = vpop.f32.mrf.mxu0
            %v455 = vadd.f32 0.0, %v454
            %456 = vdwg.mxu0
            %v457 = vadd.f32 %v379, %v446
            %v458 = vadd.f32 %v380, %v449
            %v459 = vadd.f32 %v381, %v452
            %v460 = vadd.f32 %v382, %v455
            %vm461 = vcmask 138240
            %462 = vst.msk [vmem:[%s6] sm:$0xff] %vm461, %v457
            %463 = vst.msk [vmem:[%s6 + $0x8] sm:$0xff] %vm461, %v458
            %464 = vst.msk [vmem:[%s6 + $0x10] sm:$0xff] %vm461, %v459
            %465 = vst.msk [vmem:[%s6 + $0x18] sm:$0xff] %vm461, %v460
          $region68: #{tpu_custom_call.1} parent=63 // pred_fallthru
            _
          %p466 = scmp.le.s32.totalorder %s296, 1
          %p467 = scmp.ge.s32.totalorder %s297, 1
          %p468 = pnand %p466, %p467
          %p469 = pneg %p468
          // Predicated region
          $region69: #{tpu_custom_call.1} parent=63 // pred_check
            _
          $region70: #{tpu_custom_call.1} parent=63 // pred_check_branch
            %471 = sbr.rel (%p468) target = $region72
          $region71: #{tpu_custom_call.1} parent=63 // pred_region
            %v472 = vld [vmem:[#allocation2 + $0x1] sm:$0x1]
            %v473 = vsub.f32 %v294, %v354
            %s475 = vtos %v472
            %v476 = vstv %s475
            %v478 = vsub.f32 %v473, %v476
            %v479 = vmul.f32 %v478, 1.442695
            %v480 = vpow.pop %v479
            %v481 = vadd.f32 %v480, 0.0001
            %v482 = vmul.f32 %v481, 0.17677669
            %vm483 = vcmp.eq.s32.totalorder %v269, 1
            %v484 = vsel %vm483, 1, 0
            %485 = vset.pattern.permute.xlu0 0
            %486 = vperm.xlu0 %485, %v484
            %v487 = vpop.permute.xlu0 %486
            %vm488 = vcmp.eq.s32.totalorder %v487, 1
            %v489 = vsel %vm488, %v482, 0.0
            %s490 = scalar_lea.vmem %s6, 32
            %v491 = vld [vmem:[%s490] sm:$0xff]
            %v492 = vld [vmem:[%s490 + $0x8] sm:$0xff]
            %v493 = vld [vmem:[%s490 + $0x10] sm:$0xff]
            %v494 = vld [vmem:[%s490 + $0x18] sm:$0xff]
            %495 = vxpose.xlu0.b32.start [1/16] %v489, 128
            %496 = vxpose.xlu0.b32.cont [2/16] 0.0, 128
            %497 = vxpose.xlu0.b32.cont [3/16] 0.0, 128
            %498 = vxpose.xlu0.b32.cont [4/16] 0.0, 128
            %499 = vxpose.xlu0.b32.cont [5/16] 0.0, 128
            %500 = vxpose.xlu0.b32.cont [6/16] 0.0, 128
            %501 = vxpose.xlu0.b32.cont [7/16] 0.0, 128
            %502 = vxpose.xlu0.b32.cont [8/16] 0.0, 128
            %503 = vxpose.xlu0.b32.cont [9/16] 0.0, 128
            %504 = vxpose.xlu0.b32.cont [10/16] 0.0, 128
            %505 = vxpose.xlu0.b32.cont [11/16] 0.0, 128
            %506 = vxpose.xlu0.b32.cont [12/16] 0.0, 128
            %507 = vxpose.xlu0.b32.cont [13/16] 0.0, 128
            %508 = vxpose.xlu0.b32.cont [14/16] 0.0, 128
            %509 = vxpose.xlu0.b32.cont [15/16] 0.0, 128
            %510 = vxpose.xlu0.b32.end [16/16] 0.0, 128
            %v511 = vpop.trf.xlu0
            %v512 = vpop.trf.xlu0
            %v513 = vpop.trf.xlu0
            %v514 = vpop.trf.xlu0
            %v515 = vpop.trf.xlu0
            %v516 = vpop.trf.xlu0
            %v517 = vpop.trf.xlu0
            %v518 = vpop.trf.xlu0
            %v519 = vpop.trf.xlu0
            %v520 = vpop.trf.xlu0
            %v521 = vpop.trf.xlu0
            %v522 = vpop.trf.xlu0
            %v523 = vpop.trf.xlu0
            %v524 = vpop.trf.xlu0
            %v525 = vpop.trf.xlu0
            %v526 = vpop.trf.xlu0
            %vm527 = vcmask 64512
            %v529 = vsel %vm527, %v511, 0
            %v532 = vsel %vm527, %v512, 0
            %v535 = vsel %vm527, %v513, 0
            %v538 = vsel %vm527, %v514, 0
            %540 = vmatpush.msra.mxu0 0.0
            %541 = vmatpush.msra.mxu0 0.0
            %542 = vmatpush.msra.mxu0 0.0
            %543 = vmatpush.msra.mxu0 0.0
            %544 = vmatpush.msra.mxu0 0.0
            %545 = vmatpush.msra.mxu0 0.0
            %546 = vmatpush.msra.mxu0 0.0
            %547 = vmatpush.msra.mxu0 0.0
            %548 = vmatpush.msra.mxu0 0.0
            %549 = vmatpush.msra.mxu0 0.0
            %550 = vmatpush.msra.mxu0 0.0
            %551 = vmatpush.msra.mxu0 0.0
            %552 = vmatpush.msra.mxu0 0.0
            %553 = vmatpush.msra.mxu0 0.0
            %554 = vmatpush.msra.mxu0 0.0
            %555 = vmatpush.msra.mxu0 %v349
            %556 = vmatmul.f32.gmra.mxu0 %v529
            %v557 = vpop.f32.mrf.mxu0
            %v558 = vadd.f32 0.0, %v557
            %559 = vmatmul.f32.gmra.mxu0 %v532
            %v560 = vpop.f32.mrf.mxu0
            %v561 = vadd.f32 0.0, %v560
            %562 = vmatmul.f32.gmra.mxu0 %v535
            %v563 = vpop.f32.mrf.mxu0
            %v564 = vadd.f32 0.0, %v563
            %565 = vmatmul.f32.gmra.mxu0 %v538
            %v566 = vpop.f32.mrf.mxu0
            %v567 = vadd.f32 0.0, %v566
            %568 = vdwg.mxu0
            %v569 = vadd.f32 %v491, %v558
            %v570 = vadd.f32 %v492, %v561
            %v571 = vadd.f32 %v493, %v564
            %v572 = vadd.f32 %v494, %v567
            %vm573 = vcmask 138240
            %574 = vst.msk [vmem:[%s490] sm:$0xff] %vm573, %v569
            %575 = vst.msk [vmem:[%s490 + $0x8] sm:$0xff] %vm573, %v570
            %576 = vst.msk [vmem:[%s490 + $0x10] sm:$0xff] %vm573, %v571
            %577 = vst.msk [vmem:[%s490 + $0x18] sm:$0xff] %vm573, %v572
          $region72: #{tpu_custom_call.1} parent=63 // pred_fallthru
            _
        $region64: #{tpu_custom_call.1} parent=35 // pred_fallthru
          _
        // Predicated region
        $region73: #{tpu_custom_call.1} parent=35 // pred_check
          %p578 = pneg %p145
        $region74: #{tpu_custom_call.1} parent=35 // pred_check_branch
          %580 = sbr.rel (%p578) target = $region76
        $region75: #{tpu_custom_call.1} parent=35 // pred_region
          _
        $region76: #{tpu_custom_call.1} parent=35 // pred_fallthru
          _
        // Predicated region
        $region77: #{tpu_custom_call.1} parent=35 // pred_check
          %p581 = pneg %p145
        $region78: #{tpu_custom_call.1} parent=35 // pred_check_branch
          %583 = sbr.rel (%p581) target = $region80
        $region79: #{tpu_custom_call.1} parent=35 // pred_region
          _
        $region80: #{tpu_custom_call.1} parent=35 // pred_fallthru
          _
      $region36: #{tpu_custom_call.1} parent=5 // pred_fallthru
        _
      %p584 = scmp.le.s32.totalorder 2, %s16
      // Predicated region
      $region81: #{tpu_custom_call.1} parent=5 // pred_check
        %p585 = pneg %p584
      $region82: #{tpu_custom_call.1} parent=5 // pred_check_branch
        %587 = sbr.rel (%p585) target = $region84
      $region83: #{tpu_custom_call.1} parent=5 // pred_region
        %s588 = ssub.s32 %s16, 2
      $region84: #{tpu_custom_call.1} parent=5 // pred_fallthru
        _
    $region6: #{tpu_custom_call.1} parent=1 // loop_footer
      %s20 = sadd.s32 1, %s16
    $region7: #{tpu_custom_call.1} parent=1 // loop_footer_branch
      %15 = sbr.rel target = $region3
    $region8: #{tpu_custom_call.1} parent=1 // loop_exit
      _
    %589 = vsyncpa [#allocation7], 1
    %s590 = scalar_lea.sflag [#allocation7], 1
    %591 = vsyncpa %s590, 1
    %592 = vsyncpa [#allocation9], 1

</llo_original>
